<compile_context>
chip_gen: v6e
topology: v6e:2x2x1
jax: 0.10.0
libtpu: 0.0.40
codegen_flags: <defaults>
</compile_context>

<pallas_src>
import functools

import jax
import jax.numpy as jnp
from jax.experimental import pallas as pl
from jax.experimental.pallas import tpu as pltpu

POWER = 2
EPS = 1e-07

LANE = 128
SUBLANE = 8
# ~4 MiB of f32 per block (2 MiB for bf16 DMA buffers): big enough to hide the
# per-grid-step overhead, small enough that 2x in + 2x out + f32 temps stay
# far below the 64 MiB v7x VMEM.
MAX_BLOCK_ELEMS = 1 << 20


def _normalize_kernel(x_ref, o_ref, *, power):
    # x_ref / o_ref: (B_blk, C, rows_tile, 128).  Channel axis (1) is fully
    # resident in the tile, so the reduction is local (no accumulator).
    x = x_ref[...].astype(jnp.float32)

    if power == 2:
        # Per-element work stays on the 4-slot VALU (no jnp.power / EUP).
        s = jnp.sum(x * x, axis=1, keepdims=True)            # (B, 1, rows, 128)
        norm = jnp.sqrt(s)
    else:
        # Module semantics: sum(x**p)**(1/p), no abs().
        s = jnp.sum(jnp.power(x, power), axis=1, keepdims=True)
        norm = jnp.power(s, 1.0 / power)

    # One exact reciprocal per output lane, then a cheap broadcast multiply
    # across the C channels (instead of C divides per lane).
    inv = pl.reciprocal(norm + EPS, approx=False)             # (B, 1, rows, 128)
    o_ref[...] = (x * inv).astype(o_ref.dtype)


def _largest_divisor_leq(n, cap):
    cap = max(1, min(n, cap))
    for d in range(cap, 0, -1):
        if n % d == 0:
            return d
    return 1


def _choose_tiling(N, C, HW):
    """Returns (padded HW, R = padded_HW//128, rows_tile, batch block)."""
    hwp = pl.cdiv(HW, LANE) * LANE            # lane-dense last dim
    R = hwp // LANE
    per_row_elems = C * LANE                  # one (C, 1, 128) slab per image
    rows_cap = max(1, MAX_BLOCK_ELEMS // per_row_elems)

    if R <= rows_cap:
        rows_tile = R                         # full extent: always legal
    else:
        # Split rows: tile must be a multiple of 8; pad R so it divides evenly
        # (padding <= rows_tile-1 rows, negligible at these sizes).
        rows_tile = max(SUBLANE, (rows_cap // SUBLANE) * SUBLANE)
        R = pl.cdiv(R, rows_tile) * rows_tile
        hwp = R * LANE

    per_batch_elems = C * rows_tile * LANE
    b_cap = max(1, MAX_BLOCK_ELEMS // per_batch_elems)
    b_blk = _largest_divisor_leq(N, b_cap)

    # Keep at least 2 grid steps when possible so both v7x TensorCores get work.
    if N > 1 and (N // b_blk) * (R // rows_tile) < 2:
        b_blk = _largest_divisor_leq(N, max(1, N // 2))

    return hwp, R, rows_tile, b_blk


def normalize(x, power=POWER):
    """x: (N, C, H, W) float array. Returns x normalized over dim 1."""
    N, C, H, W = x.shape
    HW = H * W
    hwp, R, rows_tile, b_blk = _choose_tiling(N, C, HW)

    x2 = x.reshape(N, C, HW)
    if hwp != HW:
        x2 = jnp.pad(x2, ((0, 0), (0, 0), (0, hwp - HW)))
    x4 = x2.reshape(N, C, R, LANE)

    itemsize = jnp.dtype(x.dtype).itemsize
    block_elems = b_blk * C * rows_tile * LANE
    # 2x double-buffered in + 2x out (input dtype) + ~3 f32-block temporaries.
    required = 4 * block_elems * itemsize + 3 * block_elems * 4 + (2 << 20)
    vmem_limit = min(max(16 << 20, required), 100 << 20)

    cost = pl.CostEstimate(
        flops=3 * N * C * hwp,
        transcendentals=2 * N * hwp,
        bytes_accessed=2 * N * C * hwp * itemsize,
    )

    kernel = functools.partial(_normalize_kernel, power=power)
    spec = pl.BlockSpec((b_blk, C, rows_tile, LANE), lambda b, r: (b, 0, r, 0))

    out = pl.pallas_call(
        kernel,
        out_shape=jax.ShapeDtypeStruct((N, C, R, LANE), x.dtype),
        grid_spec=pltpu.PrefetchScalarGridSpec(
            num_scalar_prefetch=0,
            grid=(N // b_blk, R // rows_tile),
            in_specs=[spec],
            out_specs=spec,
        ),
        compiler_params=pltpu.CompilerParams(
            dimension_semantics=("parallel", "parallel"),
            vmem_limit_bytes=vmem_limit,
        ),
        cost_estimate=cost,
    )(x4)

    out = out.reshape(N, C, hwp)
    if hwp != HW:
        out = out[:, :, :HW]
    return out.reshape(N, C, H, W)


def _reference(x, power=POWER):
    norm = jnp.power(jnp.sum(jnp.power(x, power), axis=1, keepdims=True), 1.0 / power)
    return x / (norm + EPS)


if __name__ == "__main__":
    key = jax.random.PRNGKey(0)

    # Small NCHW input consistent with the module's forward (reduce over dim 1).
    x = jax.random.normal(key, (2, 4, 16, 16), dtype=jnp.float32)
    out = jax.block_until_ready(normalize(x))
    ref = _reference(x)
    assert out.shape == x.shape and out.dtype == x.dtype
    assert jnp.allclose(out, ref, atol=1e-5, rtol=1e-5), "mismatch vs reference"

    # Exercise the HW-not-multiple-of-128 (pad + slice) path as well.
    x2 = jax.random.normal(jax.random.PRNGKey(1), (2, 3, 10, 10), dtype=jnp.float32)
    out2 = jax.block_until_ready(normalize(x2))
    ref2 = _reference(x2)
    assert out2.shape == x2.shape and out2.dtype == x2.dtype
    assert jnp.allclose(out2, ref2, atol=1e-5, rtol=1e-5), "mismatch vs reference (padded)"

    print("KERNEL_OK")
</pallas_src>

<mosaic_0001>
module attributes {stable_mosaic.version = 11 : i64} {
  func.func @_normalize_kernel(%arg0: i32, %arg1: i32, %arg2: memref<1x4x2x128xf32, #tpu.memory_space<vmem>>, %arg3: memref<1x4x2x128xf32, #tpu.memory_space<vmem>>) attributes {dimension_semantics = [#tpu.dimension_semantics<parallel>, #tpu.dimension_semantics<parallel>], iteration_bounds = array<i64: 2, 1>, scalar_prefetch = 0 : i64, scratch_operands = 0 : i64, tpu.core_type = #tpu.core_type<tc>, window_params = [{transform_indices = @transform_0, window_bounds = array<i64: 1, 4, 2, 128>}, {transform_indices = @transform_1, window_bounds = array<i64: 1, 4, 2, 128>}]} {
    %c0 = arith.constant 0 : index
    %c0_0 = arith.constant 0 : index
    %c0_1 = arith.constant 0 : index
    %c0_2 = arith.constant 0 : index
    %0 = vector.load %arg2[%c0, %c0_0, %c0_1, %c0_2] : memref<1x4x2x128xf32, #tpu.memory_space<vmem>>, vector<1x4x2x128xf32>
    %1 = arith.mulf %0, %0 : vector<1x4x2x128xf32>
    %cst = arith.constant dense<0.000000e+00> : vector<1x2x128xf32>
    %2 = vector.multi_reduction <add>, %1, %cst [1] : vector<1x4x2x128xf32> to vector<1x2x128xf32>
    %3 = vector.shape_cast %2 : vector<1x2x128xf32> to vector<1x1x2x128xf32>
    %4 = math.sqrt %3 : vector<1x1x2x128xf32>
    %cst_3 = arith.constant 1.000000e-07 : f32
    %5 = vector.broadcast %cst_3 : f32 to vector<1x1x2x128xf32>
    %6 = arith.addf %4, %5 : vector<1x1x2x128xf32>
    %7 = tpu.reciprocal %6 : vector<1x1x2x128xf32> -> vector<1x1x2x128xf32>
    %8 = vector.broadcast %7 : vector<1x1x2x128xf32> to vector<1x4x2x128xf32>
    %9 = arith.mulf %0, %8 : vector<1x4x2x128xf32>
    %c0_4 = arith.constant 0 : index
    %c0_5 = arith.constant 0 : index
    %c0_6 = arith.constant 0 : index
    %c0_7 = arith.constant 0 : index
    %10 = vector.load %arg3[%c0_4, %c0_5, %c0_6, %c0_7] : memref<1x4x2x128xf32, #tpu.memory_space<vmem>>, vector<1x4x2x128xf32>
    tpu.vector_store %arg3[%c0_4, %c0_5, %c0_6, %c0_7], %9 {strides = array<i32>} : memref<1x4x2x128xf32, #tpu.memory_space<vmem>>, vector<1x4x2x128xf32>,
    return
  }
  func.func @transform_0(%arg0: i32, %arg1: i32) -> (i32, i32, i32, i32) {
    %c0_i32 = arith.constant 0 : i32
    %c0_i32_0 = arith.constant 0 : i32
    %c0_i32_1 = arith.constant 0 : i32
    return %arg0, %c0_i32, %arg1, %c0_i32_0 : i32, i32, i32, i32
  }
  func.func @transform_1(%arg0: i32, %arg1: i32) -> (i32, i32, i32, i32) {
    %c0_i32 = arith.constant 0 : i32
    %c0_i32_0 = arith.constant 0 : i32
    %c0_i32_1 = arith.constant 0 : i32
    return %arg0, %c0_i32, %arg1, %c0_i32_0 : i32, i32, i32, i32
  }
}

</mosaic_0001>

<llo_original>
// kernel: tpu_custom_call.1
$region0: #{tpu_custom_call.1}
  #allocation0 [shape = 'u32[]', space=smem, size = 0x4, offset = 0x4, fixed_abs, tag = 'smem constant byte address 0x4 - core index']
  #allocation1 [shape = 'u32[144,128]{1,0:T(1,128)}', space=vmem, size = 0x12000, scoped, tag = 'internal scratch']
  %s0 = inlined_call_operand.hbm [shape: f32[2,4,2,128], index: 0, kind: input, shape index: {}]
  %s1 = inlined_call_operand.hbm [shape: f32[2,4,2,128], index: 1, kind: output, shape index: {}]
  %s2 = sld [smem:[#allocation0]]
  $region41: #{tpu_custom_call.1} parent=0
    _
  %s4 = ssub.s32 1, %s2
  %s5 = scalar_select 0, %s4, %s2
  $region1: #{tpu_custom_call.1} parent=0
    #allocation2 [shape = 'u8[8192]{0}', space=vmem, size = 0x2000, scoped, tag = 'input window, operand 0']
    #allocation3 [shape = 's32[2]{0}', space=sflag, size = 0x8, scoped, tag = 'scoped memory for tpu_custom_call.1']
    #allocation4 [shape = 's32[2]{0}', space=sflag, size = 0x8, scoped, tag = 'scoped memory for tpu_custom_call.1']
    #allocation5 [shape = 'u8[8192]{0}', space=vmem, size = 0x2000, scoped, tag = 'output window, operand 0']
    %6 = vsyncpa [#allocation3], 0
    %s7 = scalar_lea.sflag [#allocation3], 1
    %8 = vsyncpa %s7, 0
    %9 = vsyncpa [#allocation4], 0
    %s10 = scalar_lea.sflag [#allocation4], 1
    %11 = vsyncpa %s10, 0
    loop: start=0, step=1, limit=4
    $region2: #{tpu_custom_call.1} parent=1 // loop_pre_header
      _
    $region3: #{tpu_custom_call.1} parent=1 // loop_header
      %s13 = sphi 0, %s17
      %p14 = scmp.ge.s32.totalorder %s13, 4
      %s20 = sphi 0, %s32
      %s21 = sphi 0, %s28
      %s22 = sphi 0, %s20
      %s23 = sphi 0, %s21
      %s24 = sphi 0, %s22
      %s25 = sphi 0, %s23
      %s37 = sphi 0, %s39
      %s40 = sphi 0, %s37
      %s41 = sphi 0, %s40
      %s57 = sphi 0, %s41
      %s65 = sphi 0, %s67
      %s68 = sphi 0, %s65
      %s69 = sphi 0, %s68
      %s85 = sphi 0, %s69
    $region4: #{tpu_custom_call.1} parent=1 // loop_header_branch
      %16 = sbr.rel (%p14) target = $region8
    $region5: #{tpu_custom_call.1} parent=1 // loop_body
      %s18 = ssub.s32 %s13, 1
      %s19 = ssub.s32 %s13, 2
      %s26 = sadd.s32 1, %s21
      %p27 = scmp.ge.s32.totalorder %s26, 1
      %s28 = scalar_select %p27, 0, %s26
      %s29 = sadd.s32 1, %s20
      %s30 = scalar_select %p27, %s29, %s20
      %p31 = scmp.ge.s32.totalorder %s30, 2
      %s32 = scalar_select %p31, 0, %s30
      %s33 = ssub.s32 %s20, %s32
      %s34 = ssub.s32 %s21, %s28
      %s35 = sor.u32 %s33, %s34
      %p36 = scmp.eq.s32.totalorder %s35, 0
      %s38 = sadd.s32 %s37, 1
      %s39 = scalar_select %p36, %s37, %s38
      %p42 = pneg %p36
      %p43 = scmp.eq.s32.totalorder %s13, 1
      %p44 = por %p42, %p43
      %p45 = scmp.ne.s32.totalorder %s37, %s40
      %p46 = scmp.eq.s32.totalorder %s13, 0
      %p47 = por %p45, %p46
      %p48 = scmp.ne.s32.totalorder %s37, %s40
      %p49 = scmp.eq.s32.totalorder %s18, 1
      %p50 = por %p48, %p49
      %p51 = scmp.ne.s32.totalorder %s40, %s41
      %p52 = scmp.eq.s32.totalorder %s18, 0
      %p53 = por %p51, %p52
      %p54 = scmp.ne.s32.totalorder %s40, %s41
      %p55 = scmp.eq.s32.totalorder %s19, 1
      %p56 = por %p54, %p55
      %p58 = scmp.ne.s32.totalorder %s41, %s57
      %p59 = scmp.eq.s32.totalorder %s19, 0
      %p60 = por %p58, %p59
      %s61 = ssub.s32 %s20, %s32
      %s62 = ssub.s32 %s21, %s28
      %s63 = sor.u32 %s61, %s62
      %p64 = scmp.eq.s32.totalorder %s63, 0
      %s66 = sadd.s32 %s65, 1
      %s67 = scalar_select %p64, %s65, %s66
      %p70 = pneg %p64
      %p71 = scmp.eq.s32.totalorder %s13, 1
      %p72 = por %p70, %p71
      %p73 = scmp.ne.s32.totalorder %s65, %s68
      %p74 = scmp.eq.s32.totalorder %s13, 0
      %p75 = por %p73, %p74
      %p76 = scmp.ne.s32.totalorder %s65, %s68
      %p77 = scmp.eq.s32.totalorder %s18, 1
      %p78 = por %p76, %p77
      %p79 = scmp.ne.s32.totalorder %s68, %s69
      %p80 = scmp.eq.s32.totalorder %s18, 0
      %p81 = por %p79, %p80
      %p82 = scmp.ne.s32.totalorder %s68, %s69
      %p83 = scmp.eq.s32.totalorder %s19, 1
      %p84 = por %p82, %p83
      %p86 = scmp.ne.s32.totalorder %s69, %s85
      %p87 = scmp.eq.s32.totalorder %s19, 0
      %p88 = por %p86, %p87
      %p89 = scmp.le.s32.totalorder 1, %s13
      %p90 = scmp.lt.s32.totalorder %s13, 3
      %p91 = pnand %p89, %p90
      %p92 = pneg %p91
      // Predicated region
      $region9: #{tpu_custom_call.1} parent=5 // pred_check
        _
      $region10: #{tpu_custom_call.1} parent=5 // pred_check_branch
        %94 = sbr.rel (%p91) target = $region12
      $region11: #{tpu_custom_call.1} parent=5 // pred_region
        %s95 = ssub.s32 %s13, 1
      $region12: #{tpu_custom_call.1} parent=5 // pred_fallthru
        _
      %p96 = scmp.lt.s32.totalorder %s13, 2
      // Predicated region
      $region13: #{tpu_custom_call.1} parent=5 // pred_check
        %p97 = pneg %p96
      $region14: #{tpu_custom_call.1} parent=5 // pred_check_branch
        %99 = sbr.rel (%p97) target = $region16
      $region15: #{tpu_custom_call.1} parent=5 // pred_region
        // Predicated region
        $region17: #{tpu_custom_call.1} parent=15 // pred_check
          %p100 = pneg %p47
        $region18: #{tpu_custom_call.1} parent=15 // pred_check_branch
          %102 = sbr.rel (%p100) target = $region20
        $region19: #{tpu_custom_call.1} parent=15 // pred_region
          %s103 = sand.u32 %s37, 1
          %s104 = scalar_lea.sflag [#allocation3], %s103
          %s105 = sand.u32 %s37, 1
          %s106 = smul.addr %s105, 8
          %s107 = scalar_lea.vmem [#allocation2], %s106
          %s109 = ssub.s32 128, 128
          %110 = vsyncadd %s104, %s109
          %s111 = smul.addr %s20, 4
          %s112 = sadd.s32 %s21, %s111
          %s113 = smul.addr %s112, 32
          %s114 = scalar_lea.hbm %s0, %s113
          %s115 = sshll.u32 %s107, 4
          %s116 = int_to_ptr.vmem [resolvable:$true] %s115
          %121 = dma.hbm_to_vmem [thread:$0]  %s114, 128, %s116, %s104, 32, 32, 2
        $region20: #{tpu_custom_call.1} parent=15 // pred_fallthru
          _
      $region16: #{tpu_custom_call.1} parent=5 // pred_fallthru
        _
      %p122 = scmp.le.s32.totalorder 1, %s13
      %p123 = scmp.lt.s32.totalorder %s13, 3
      %p124 = pnand %p122, %p123
      %p125 = pneg %p124
      // Predicated region
      $region21: #{tpu_custom_call.1} parent=5 // pred_check
        _
      $region22: #{tpu_custom_call.1} parent=5 // pred_check_branch
        %127 = sbr.rel (%p124) target = $region24
      $region23: #{tpu_custom_call.1} parent=5 // pred_region
        %s128 = ssub.s32 %s13, 1
        %s129 = sand.u32 %s40, 1
        %s130 = scalar_lea.sflag [#allocation3], %s129
        %s131 = sand.u32 %s40, 1
        %s132 = smul.addr %s131, 8
        %s133 = scalar_lea.vmem [#allocation2], %s132
        // Predicated region
        $region25: #{tpu_custom_call.1} parent=23 // pred_check
          %p134 = pneg %p53
        $region26: #{tpu_custom_call.1} parent=23 // pred_check_branch
          %136 = sbr.rel (%p134) target = $region28
        $region27: #{tpu_custom_call.1} parent=23 // pred_region
          %137 = dma.done %s130, 128
        $region28: #{tpu_custom_call.1} parent=23 // pred_fallthru
          _
        %s138 = sand.u32 %s40, 1
        %s139 = scalar_lea.sflag [#allocation3], %s138
        %s140 = sand.u32 %s40, 1
        %s141 = smul.addr %s140, 8
        %s142 = scalar_lea.vmem [#allocation2], %s141
        %p143 = pneg %p53
        %p144 = pneg %p50
        %p145 = pneg %p81
        %p146 = pneg %p78
        %s147 = sand.u32 %s68, 1
        %s148 = scalar_lea.sflag [#allocation4], %s147
        %s149 = sand.u32 %s68, 1
        %s150 = smul.addr %s149, 8
        %s151 = scalar_lea.vmem [#allocation5], %s150
        %v152 = vld [vmem:[%s133] sm:$0x3]
        %v153 = vld [vmem:[%s133 + $0x2] sm:$0x3]
        %v154 = vld [vmem:[%s133 + $0x4] sm:$0x3]
        %v155 = vld [vmem:[%s133 + $0x6] sm:$0x3]
        %v156 = vmul.f32 %v152, %v152
        %v157 = vmul.f32 %v153, %v153
        %v158 = vmul.f32 %v154, %v154
        %v159 = vmul.f32 %v155, %v155
        %vm160 = vcmask 1041408
        %v161 = vsel %vm160, %v156, 0.0
        %v162 = vsel %vm160, %v157, 0.0
        %v163 = vadd.f32 %v161, %v162
        %v164 = vsel %vm160, %v158, 0.0
        %v165 = vadd.f32 %v163, %v164
        %v166 = vsel %vm160, %v159, 0.0
        %v167 = vadd.f32 %v165, %v166
        %v168 = vrsqrt.pop %v167
        %v169 = vmul.f32 %v167, %v168
        %vm170 = vcmp.eq.f32.partialorder %v167, inf
        %v171 = vsel %vm170, %v167, %v169
        %vm172 = vcmp.eq.f32.partialorder %v167, 0.0
        %v173 = vand.u32 %v167, 2147483648
        %v174 = vsel %vm172, %v173, %v171
        %v175 = vadd.f32 %v174, 1e-07
        %v176 = vrcp.pop %v175
        %v177 = vmul.f32 %v152, %v176
        %v178 = vmul.f32 %v153, %v176
        %v179 = vmul.f32 %v154, %v176
        %v180 = vmul.f32 %v155, %v176
        %181 = vst [vmem:[%s151] sm:$0x3] %v177
        %182 = vst [vmem:[%s151 + $0x2] sm:$0x3] %v178
        %183 = vst [vmem:[%s151 + $0x4] sm:$0x3] %v179
        %184 = vst [vmem:[%s151 + $0x6] sm:$0x3] %v180
        %s185 = sand.u32 %s68, 1
        %s186 = scalar_lea.sflag [#allocation4], %s185
        %s187 = sand.u32 %s68, 1
        %s188 = smul.addr %s187, 8
        %s189 = scalar_lea.vmem [#allocation5], %s188
        // Predicated region
        $region29: #{tpu_custom_call.1} parent=23 // pred_check
          %p190 = pneg %p78
        $region30: #{tpu_custom_call.1} parent=23 // pred_check_branch
          %192 = sbr.rel (%p190) target = $region32
        $region31: #{tpu_custom_call.1} parent=23 // pred_region
          %s194 = ssub.s32 128, 128
          %195 = vsyncadd %s186, %s194
          %s196 = smul.addr %s22, 4
          %s197 = sadd.s32 %s23, %s196
          %s198 = smul.addr %s197, 32
          %s199 = scalar_lea.hbm %s1, %s198
          %s200 = sshll.u32 %s189, 4
          %s201 = int_to_ptr.vmem [resolvable:$true] %s200
          %206 = dma.vmem_to_hbm [thread:$0]  %s201, 128, %s199, %s186, 32, 32, 2
        $region32: #{tpu_custom_call.1} parent=23 // pred_fallthru
          _
      $region24: #{tpu_custom_call.1} parent=5 // pred_fallthru
        _
      %p207 = scmp.le.s32.totalorder 2, %s13
      // Predicated region
      $region33: #{tpu_custom_call.1} parent=5 // pred_check
        %p208 = pneg %p207
      $region34: #{tpu_custom_call.1} parent=5 // pred_check_branch
        %210 = sbr.rel (%p208) target = $region36
      $region35: #{tpu_custom_call.1} parent=5 // pred_region
        %s211 = ssub.s32 %s13, 2
        // Predicated region
        $region37: #{tpu_custom_call.1} parent=35 // pred_check
          %p212 = pneg %p84
        $region38: #{tpu_custom_call.1} parent=35 // pred_check_branch
          %214 = sbr.rel (%p212) target = $region40
        $region39: #{tpu_custom_call.1} parent=35 // pred_region
          %s215 = sand.u32 %s69, 1
          %s216 = scalar_lea.sflag [#allocation4], %s215
          %s217 = sand.u32 %s69, 1
          %s218 = smul.addr %s217, 8
          %s219 = scalar_lea.vmem [#allocation5], %s218
          %220 = dma.done %s216, 128
        $region40: #{tpu_custom_call.1} parent=35 // pred_fallthru
          _
      $region36: #{tpu_custom_call.1} parent=5 // pred_fallthru
        _
    $region6: #{tpu_custom_call.1} parent=1 // loop_footer
      %s17 = sadd.s32 1, %s13
    $region7: #{tpu_custom_call.1} parent=1 // loop_footer_branch
      %12 = sbr.rel target = $region3
    $region8: #{tpu_custom_call.1} parent=1 // loop_exit
      _
    %221 = vsyncpa [#allocation3], 1
    %s222 = scalar_lea.sflag [#allocation3], 1
    %223 = vsyncpa %s222, 1
    %224 = vsyncpa [#allocation4], 1
    %s225 = scalar_lea.sflag [#allocation4], 1
    %226 = vsyncpa %s225, 1

</llo_original>
